<compile_context>
chip_gen: v7x
topology: tpu7x:2x2x1
jax: 0.10.0
libtpu: 0.0.40
codegen_flags: <defaults>
</compile_context>

<pallas_src>
import functools

import jax
import jax.numpy as jnp
from jax.experimental import pallas as pl
from jax.experimental.pallas import tpu as pltpu

LN_EPS = 1e-5  # PyTorch nn.LayerNorm default


def _gelu_exact(x):
    # PyTorch nn.GELU() default = exact (erf-based) GELU, computed in f32.
    # TODO(synk): tanh-approx GELU would ride the EUP slot (cheaper on v6e/v7x
    #             when VALU-bound) but changes numerics vs. the erf reference.
    return 0.5 * x * (1.0 + jax.lax.erf(x * 0.7071067811865476))


def mixer_block_kernel(
    x_ref,                 # (Bt, N, D)   input block
    ln1w_ref, ln1b_ref,    # (1, D) f32 each
    tw1t_ref, tb1_ref,     # (N, T) bf16 (pre-transposed), (1, T) f32
    tw2t_ref, tb2_ref,     # (T, N) bf16 (pre-transposed), (1, N) f32
    ln2w_ref, ln2b_ref,    # (1, D) f32 each
    cw1t_ref, cb1_ref,     # (D, C) bf16 (pre-transposed), (1, C) f32
    cw2t_ref, cb2_ref,     # (C, D) bf16 (pre-transposed), (1, D) f32
    o_ref,                 # (Bt, N, D)
    *, c_chunk, n_cchunks,
):
    bt, n, d = x_ref.shape
    x = x_ref[...].astype(jnp.float32)                 # (Bt, N, D)

    # ---- token_mix: LayerNorm over D (f32) --------------------------------
    mu = jnp.mean(x, axis=-1, keepdims=True)
    var = jnp.mean((x - mu) * (x - mu), axis=-1, keepdims=True)
    y = (x - mu) * jax.lax.rsqrt(var + LN_EPS)
    y = y * ln1w_ref[...] + ln1b_ref[...]              # (Bt, N, D)

    # 'b n d -> (b d) n': one wide M = Bt*D matmul pair instead of Bt small
    # per-batch matmuls (better MXU fill, one fewer f32 buffer).
    yt = jnp.swapaxes(y, 1, 2).reshape(bt * d, n).astype(jnp.bfloat16)   # (Bt*D, N)
    h = jnp.dot(yt, tw1t_ref[...], preferred_element_type=jnp.float32)   # (Bt*D, T)
    h = _gelu_exact(h + tb1_ref[...])
    t = jnp.dot(h.astype(jnp.bfloat16), tw2t_ref[...],
                preferred_element_type=jnp.float32)                      # (Bt*D, N)
    t = t + tb2_ref[...]
    tmix = jnp.swapaxes(t.reshape(bt, d, n), 1, 2)                       # (Bt, N, D)

    x1 = x + tmix                                      # first residual

    # ---- channel_mix: LayerNorm over D (f32) ------------------------------
    mu2 = jnp.mean(x1, axis=-1, keepdims=True)
    var2 = jnp.mean((x1 - mu2) * (x1 - mu2), axis=-1, keepdims=True)
    y2 = (x1 - mu2) * jax.lax.rsqrt(var2 + LN_EPS)
    y2 = y2 * ln2w_ref[...] + ln2b_ref[...]            # (Bt, N, D)

    y2_2d = y2.reshape(bt * n, d).astype(jnp.bfloat16)                   # (Bt*N, D)
    x1_2d = x1.reshape(bt * n, d)
    # Fuse the second residual and the output bias into the accumulator init.
    acc0 = x1_2d + cb2_ref[...]                                          # (Bt*N, D)

    if n_cchunks == 1:
        h2 = jnp.dot(y2_2d, cw1t_ref[...], preferred_element_type=jnp.float32)
        h2 = _gelu_exact(h2 + cb1_ref[...])
        out2d = acc0 + jnp.dot(h2.astype(jnp.bfloat16), cw2t_ref[...],
                               preferred_element_type=jnp.float32)
    else:
        # Tile the hidden dim so the live f32 hidden is (Bt*N, Cc) not (Bt*N, C).
        def body(ci, acc):
            c0 = pl.multiple_of(ci * c_chunk, c_chunk)
            hc = jnp.dot(y2_2d, cw1t_ref[:, pl.ds(c0, c_chunk)],
                         preferred_element_type=jnp.float32)             # (Bt*N, Cc)
            hc = _gelu_exact(hc + cb1_ref[:, pl.ds(c0, c_chunk)])
            return acc + jnp.dot(hc.astype(jnp.bfloat16),
                                 cw2t_ref[pl.ds(c0, c_chunk), :],
                                 preferred_element_type=jnp.float32)     # (Bt*N, D)
        out2d = jax.lax.fori_loop(0, n_cchunks, body, acc0)

    o_ref[...] = out2d.reshape(bt, n, d).astype(o_ref.dtype)             # 2nd residual


# --------------------------------------------------------------------------
# Host-side planning / parameter preparation
# --------------------------------------------------------------------------

def prepare_params(params):
    """One-time conversion of PyTorch-layout params into kernel layout:
    matmul weights pre-transposed + bf16, biases / LN params as f32 rows.
    Do this ONCE, not per forward call."""
    (ln1w, ln1b, tw1, tb1, tw2, tb2,
     ln2w, ln2b, cw1, cb1, cw2, cb2) = params
    D = ln1w.shape[0]
    T = tw1.shape[0]
    N = tw2.shape[0]
    C = cw1.shape[0]
    return (
        ln1w.reshape(1, D).astype(jnp.float32),
        ln1b.reshape(1, D).astype(jnp.float32),
        tw1.T.astype(jnp.bfloat16),             # (N, T)
        tb1.reshape(1, T).astype(jnp.float32),
        tw2.T.astype(jnp.bfloat16),             # (T, N)
        tb2.reshape(1, N).astype(jnp.float32),
        ln2w.reshape(1, D).astype(jnp.float32),
        ln2b.reshape(1, D).astype(jnp.float32),
        cw1.T.astype(jnp.bfloat16),             # (D, C)
        cb1.reshape(1, C).astype(jnp.float32),
        cw2.T.astype(jnp.bfloat16),             # (C, D)
        cb2.reshape(1, D).astype(jnp.float32),
    )


def _vmem_capacity_bytes():
    try:
        info = pltpu.get_tpu_info()
        return int(getattr(info, "vmem_capacity_bytes", 64 * 1024 * 1024))
    except Exception:
        return 64 * 1024 * 1024  # conservative (v7x per-TC)


def _pick_c_chunk(C):
    if C <= 1024:
        return C
    for cc in (512, 384, 256, 128):   # 128-aligned starts -> lane-aligned slices
        if C % cc == 0:
            return cc
    return C


def _plan_block(B, N, D, T, c_chunk, x_itemsize, weight_bytes, vmem_cap):
    """Pick block_b + vmem limit from an explicit live-buffer enumeration."""
    nd = N * D
    # Live buffers per batch element (generous upper bound):
    #  ~8 f32 copies of (N, D): x, y, t, tmix/x1, y2, acc/out, slack
    #   2 bf16 copies of (N, D): yt, y2_2d
    #   token hidden (D, T): f32 + bf16
    #   channel hidden chunk (N, Cc): f32 + bf16
    #   double-buffered x / out I/O blocks: 4 copies of (N, D)
    per_batch = (8 * nd * 4 + 2 * nd * 2 + D * T * 6 + N * c_chunk * 6
                 + 4 * nd * x_itemsize)
    budget = int(0.75 * vmem_cap) - weight_bytes
    budget = max(budget, per_batch)          # always allow block_b = 1

    min_steps = 1
    if B >= 4:
        min_steps = 2                        # keep the input/output pipeline busy
    if B >= 8 and vmem_cap <= 80 * 1024 * 1024:
        min_steps = 4                        # v7x: 2 TCs share the parallel axis

    block_b = 1
    for bt in range(1, min(B, 64) + 1):
        if B % bt:
            continue
        if B // bt < min_steps:
            continue
        if bt * per_batch > budget:
            continue
        block_b = bt

    need = weight_bytes + block_b * per_batch
    vmem_limit = min(max(32 * 1024 * 1024, int(1.3 * need)),
                     int(0.8 * vmem_cap))    # leave headroom for compiler scratch
    return block_b, vmem_limit


@functools.partial(jax.jit, static_argnames=("block_b", "c_chunk", "vmem_limit"))
def _mixer_block_call(x, weights, *, block_b, c_chunk, vmem_limit):
    B, N, D = x.shape
    C = weights[8].shape[1]                  # cw1t is (D, C)
    n_cchunks = C // c_chunk
    kernel = functools.partial(mixer_block_kernel,
                               c_chunk=c_chunk, n_cchunks=n_cchunks)

    def const_spec(a):
        # Grid-invariant resident weight: full-array block, single-buffered
        # (its block index never changes, so double-buffering wastes VMEM).
        return pl.BlockSpec(a.shape, lambda b: (0, 0),
                            pipeline_mode=pl.Buffered(1))

    return pl.pallas_call(
        kernel,
        out_shape=jax.ShapeDtypeStruct((B, N, D), x.dtype),
        grid_spec=pltpu.PrefetchScalarGridSpec(
            num_scalar_prefetch=0,
            grid=(B // block_b,),
            in_specs=[pl.BlockSpec((block_b, N, D), lambda b: (b, 0, 0))]
                     + [const_spec(a) for a in weights],
            out_specs=pl.BlockSpec((block_b, N, D), lambda b: (b, 0, 0)),
        ),
        compiler_params=pltpu.CompilerParams(
            dimension_semantics=("parallel",),
            vmem_limit_bytes=int(vmem_limit)),
    )(x, *weights)


def mixer_block(x, prepared_params, block_b=None, c_chunk=None):
    """Forward pass; `prepared_params` must come from prepare_params()."""
    B, N, D = x.shape
    T = prepared_params[2].shape[1]          # tw1t is (N, T)
    C = prepared_params[8].shape[1]          # cw1t is (D, C)

    if c_chunk is None:
        c_chunk = _pick_c_chunk(C)
    assert C % c_chunk == 0, (C, c_chunk)

    weight_bytes = sum(int(a.size) * a.dtype.itemsize for a in prepared_params)
    vmem_cap = _vmem_capacity_bytes()
    auto_bt, vmem_limit = _plan_block(B, N, D, T, c_chunk, x.dtype.itemsize,
                                      weight_bytes, vmem_cap)
    if block_b is None:
        block_b = auto_bt
    assert B % block_b == 0, (B, block_b)

    return _mixer_block_call(x, prepared_params, block_b=int(block_b),
                             c_chunk=int(c_chunk), vmem_limit=int(vmem_limit))


# --------------------------------------------------------------------------
# Parameter init + pure-JAX reference (mirrors the PyTorch forward, eval mode)
# --------------------------------------------------------------------------

def init_params(key, num_patch, embed_dim, token_dim, channel_dim):
    ks = jax.random.split(key, 8)
    scale = 0.05
    ln1w = jnp.ones((embed_dim,), jnp.float32)
    ln1b = jnp.zeros((embed_dim,), jnp.float32)
    ln2w = jnp.ones((embed_dim,), jnp.float32)
    ln2b = jnp.zeros((embed_dim,), jnp.float32)
    tw1 = scale * jax.random.normal(ks[0], (token_dim, num_patch), jnp.float32)
    tb1 = scale * jax.random.normal(ks[1], (token_dim,), jnp.float32)
    tw2 = scale * jax.random.normal(ks[2], (num_patch, token_dim), jnp.float32)
    tb2 = scale * jax.random.normal(ks[3], (num_patch,), jnp.float32)
    cw1 = scale * jax.random.normal(ks[4], (channel_dim, embed_dim), jnp.float32)
    cb1 = scale * jax.random.normal(ks[5], (channel_dim,), jnp.float32)
    cw2 = scale * jax.random.normal(ks[6], (embed_dim, channel_dim), jnp.float32)
    cb2 = scale * jax.random.normal(ks[7], (embed_dim,), jnp.float32)
    return (ln1w, ln1b, tw1, tb1, tw2, tb2, ln2w, ln2b, cw1, cb1, cw2, cb2)


def mixer_block_ref(x, params):
    (ln1w, ln1b, tw1, tb1, tw2, tb2,
     ln2w, ln2b, cw1, cb1, cw2, cb2) = params

    def layernorm(v, w, b):
        mu = jnp.mean(v, axis=-1, keepdims=True)
        var = jnp.mean((v - mu) ** 2, axis=-1, keepdims=True)
        return (v - mu) / jnp.sqrt(var + LN_EPS) * w + b

    gelu = lambda v: jax.nn.gelu(v, approximate=False)

    # token mix
    y = layernorm(x, ln1w, ln1b)
    yt = jnp.swapaxes(y, 1, 2)                      # (B, D, N)
    z = gelu(yt @ tw1.T + tb1) @ tw2.T + tb2        # (B, D, N)
    x1 = x + jnp.swapaxes(z, 1, 2)
    # channel mix
    y2 = layernorm(x1, ln2w, ln2b)
    c = gelu(y2 @ cw1.T + cb1) @ cw2.T + cb2        # (B, N, D)
    return x1 + c


if __name__ == "__main__":
    # --- test 1: default path (single C chunk) -----------------------------
    B, N, D = 4, 8, 32          # batch, num_patch, embed_dim
    token_dim, channel_dim = 16, 64

    key = jax.random.PRNGKey(0)
    kx, kp = jax.random.split(key)
    x = jax.random.normal(kx, (B, N, D), jnp.float32)
    params = init_params(kp, N, D, token_dim, channel_dim)
    prepared = prepare_params(params)

    out = jax.block_until_ready(mixer_block(x, prepared))
    ref = mixer_block_ref(x, params)
    assert out.shape == (B, N, D)
    # Tolerance loosened vs. pure-f32 reference (bf16 matmul operands, f32 acc).
    assert jnp.allclose(out, ref, atol=2e-2, rtol=2e-2), (
        float(jnp.max(jnp.abs(out - ref))))

    # --- test 2: exercises the C-tiled (fori_loop) channel-mix path --------
    B2, N2, D2 = 2, 8, 32
    token_dim2, channel_dim2 = 16, 256
    kx2, kp2 = jax.random.split(jax.random.PRNGKey(1))
    x2 = jax.random.normal(kx2, (B2, N2, D2), jnp.float32)
    params2 = init_params(kp2, N2, D2, token_dim2, channel_dim2)
    prepared2 = prepare_params(params2)
    out2 = jax.block_until_ready(mixer_block(x2, prepared2, c_chunk=128))
    ref2 = mixer_block_ref(x2, params2)
    assert jnp.allclose(out2, ref2, atol=2e-2, rtol=2e-2), (
        float(jnp.max(jnp.abs(out2 - ref2))))

    print("KERNEL_OK")
</pallas_src>

<mosaic_0001>
module attributes {stable_mosaic.version = 11 : i64} {
  func.func @mixer_block_kernel(%arg0: i32, %arg1: memref<2x8x32xf32, #tpu.memory_space<vmem>>, %arg2: memref<1x32xf32, #tpu.memory_space<vmem>>, %arg3: memref<1x32xf32, #tpu.memory_space<vmem>>, %arg4: memref<8x16xbf16, #tpu.memory_space<vmem>>, %arg5: memref<1x16xf32, #tpu.memory_space<vmem>>, %arg6: memref<16x8xbf16, #tpu.memory_space<vmem>>, %arg7: memref<1x8xf32, #tpu.memory_space<vmem>>, %arg8: memref<1x32xf32, #tpu.memory_space<vmem>>, %arg9: memref<1x32xf32, #tpu.memory_space<vmem>>, %arg10: memref<32x64xbf16, #tpu.memory_space<vmem>>, %arg11: memref<1x64xf32, #tpu.memory_space<vmem>>, %arg12: memref<64x32xbf16, #tpu.memory_space<vmem>>, %arg13: memref<1x32xf32, #tpu.memory_space<vmem>>, %arg14: memref<2x8x32xf32, #tpu.memory_space<vmem>>) attributes {dimension_semantics = [#tpu.dimension_semantics<parallel>], iteration_bounds = array<i64: 2>, scalar_prefetch = 0 : i64, scratch_operands = 0 : i64, tpu.core_type = #tpu.core_type<tc>, window_params = [{transform_indices = @transform_0, window_bounds = array<i64: 2, 8, 32>}, {pipeline_mode = #tpu.pipeline_mode<synchronous>, transform_indices = @transform_1, window_bounds = array<i64: 1, 32>}, {pipeline_mode = #tpu.pipeline_mode<synchronous>, transform_indices = @transform_2, window_bounds = array<i64: 1, 32>}, {pipeline_mode = #tpu.pipeline_mode<synchronous>, transform_indices = @transform_3, window_bounds = array<i64: 8, 16>}, {pipeline_mode = #tpu.pipeline_mode<synchronous>, transform_indices = @transform_4, window_bounds = array<i64: 1, 16>}, {pipeline_mode = #tpu.pipeline_mode<synchronous>, transform_indices = @transform_5, window_bounds = array<i64: 16, 8>}, {pipeline_mode = #tpu.pipeline_mode<synchronous>, transform_indices = @transform_6, window_bounds = array<i64: 1, 8>}, {pipeline_mode = #tpu.pipeline_mode<synchronous>, transform_indices = @transform_7, window_bounds = array<i64: 1, 32>}, {pipeline_mode = #tpu.pipeline_mode<synchronous>, transform_indices = @transform_8, window_bounds = array<i64: 1, 32>}, {pipeline_mode = #tpu.pipeline_mode<synchronous>, transform_indices = @transform_9, window_bounds = array<i64: 32, 64>}, {pipeline_mode = #tpu.pipeline_mode<synchronous>, transform_indices = @transform_10, window_bounds = array<i64: 1, 64>}, {pipeline_mode = #tpu.pipeline_mode<synchronous>, transform_indices = @transform_11, window_bounds = array<i64: 64, 32>}, {pipeline_mode = #tpu.pipeline_mode<synchronous>, transform_indices = @transform_12, window_bounds = array<i64: 1, 32>}, {transform_indices = @transform_13, window_bounds = array<i64: 2, 8, 32>}]} {
    %c0 = arith.constant 0 : index
    %c0_0 = arith.constant 0 : index
    %c0_1 = arith.constant 0 : index
    %0 = vector.load %arg1[%c0, %c0_0, %c0_1] : memref<2x8x32xf32, #tpu.memory_space<vmem>>, vector<2x8x32xf32>
    %cst = arith.constant dense<0.000000e+00> : vector<2x8xf32>
    %1 = vector.multi_reduction <add>, %0, %cst [2] : vector<2x8x32xf32> to vector<2x8xf32>
    %2 = vector.shape_cast %1 : vector<2x8xf32> to vector<2x8x1xf32>
    %cst_2 = arith.constant 3.200000e+01 : f32
    %3 = vector.broadcast %cst_2 : f32 to vector<2x8x1xf32>
    %4 = arith.divf %2, %3 : vector<2x8x1xf32>
    %5 = vector.broadcast %4 : vector<2x8x1xf32> to vector<2x8x32xf32>
    %6 = arith.subf %0, %5 : vector<2x8x32xf32>
    %7 = vector.broadcast %4 : vector<2x8x1xf32> to vector<2x8x32xf32>
    %8 = arith.subf %0, %7 : vector<2x8x32xf32>
    %9 = arith.mulf %6, %8 : vector<2x8x32xf32>
    %cst_3 = arith.constant dense<0.000000e+00> : vector<2x8xf32>
    %10 = vector.multi_reduction <add>, %9, %cst_3 [2] : vector<2x8x32xf32> to vector<2x8xf32>
    %11 = vector.shape_cast %10 : vector<2x8xf32> to vector<2x8x1xf32>
    %cst_4 = arith.constant 3.200000e+01 : f32
    %12 = vector.broadcast %cst_4 : f32 to vector<2x8x1xf32>
    %13 = arith.divf %11, %12 : vector<2x8x1xf32>
    %14 = vector.broadcast %4 : vector<2x8x1xf32> to vector<2x8x32xf32>
    %15 = arith.subf %0, %14 : vector<2x8x32xf32>
    %cst_5 = arith.constant 9.99999974E-6 : f32
    %16 = vector.broadcast %cst_5 : f32 to vector<2x8x1xf32>
    %17 = arith.addf %13, %16 : vector<2x8x1xf32>
    %18 = math.rsqrt %17 : vector<2x8x1xf32>
    %19 = vector.broadcast %18 : vector<2x8x1xf32> to vector<2x8x32xf32>
    %20 = arith.mulf %15, %19 : vector<2x8x32xf32>
    %c0_6 = arith.constant 0 : index
    %c0_7 = arith.constant 0 : index
    %21 = vector.load %arg2[%c0_6, %c0_7] : memref<1x32xf32, #tpu.memory_space<vmem>>, vector<1x32xf32>
    %22 = vector.shape_cast %21 : vector<1x32xf32> to vector<1x1x32xf32>
    %23 = vector.broadcast %22 : vector<1x1x32xf32> to vector<2x8x32xf32>
    %24 = arith.mulf %20, %23 : vector<2x8x32xf32>
    %c0_8 = arith.constant 0 : index
    %c0_9 = arith.constant 0 : index
    %25 = vector.load %arg3[%c0_8, %c0_9] : memref<1x32xf32, #tpu.memory_space<vmem>>, vector<1x32xf32>
    %26 = vector.shape_cast %25 : vector<1x32xf32> to vector<1x1x32xf32>
    %27 = vector.broadcast %26 : vector<1x1x32xf32> to vector<2x8x32xf32>
    %28 = arith.addf %24, %27 : vector<2x8x32xf32>
    %29 = tpu.transpose %28, [0, 2, 1] : vector<2x8x32xf32> -> vector<2x32x8xf32>
    %30 = vector.shape_cast %29 : vector<2x32x8xf32> to vector<64x8xf32>
    %31 = arith.truncf %30 : vector<64x8xf32> to vector<64x8xbf16>
    %c0_10 = arith.constant 0 : index
    %c0_11 = arith.constant 0 : index
    %32 = vector.load %arg4[%c0_10, %c0_11] : memref<8x16xbf16, #tpu.memory_space<vmem>>, vector<8x16xbf16>
    %cst_12 = arith.constant dense<0.000000e+00> : vector<64x16xf32>
    %33 = tpu.matmul %31, %32, %cst_12 {dimension_numbers = #tpu.dot_dimension_numbers<[1], [0], [0], [1], [0, 0, 1, 1], [], []>} : vector<64x8xbf16>, vector<8x16xbf16>, vector<64x16xf32> -> vector<64x16xf32>
    %c0_13 = arith.constant 0 : index
    %c0_14 = arith.constant 0 : index
    %34 = vector.load %arg5[%c0_13, %c0_14] : memref<1x16xf32, #tpu.memory_space<vmem>>, vector<1x16xf32>
    %35 = vector.broadcast %34 : vector<1x16xf32> to vector<64x16xf32>
    %36 = arith.addf %33, %35 : vector<64x16xf32>
    %cst_15 = arith.constant 5.000000e-01 : f32
    %37 = vector.broadcast %cst_15 : f32 to vector<64x16xf32>
    %38 = arith.mulf %37, %36 : vector<64x16xf32>
    %cst_16 = arith.constant 0.707106769 : f32
    %39 = vector.broadcast %cst_16 : f32 to vector<64x16xf32>
    %40 = arith.mulf %36, %39 : vector<64x16xf32>
    %41 = math.erf %40 : vector<64x16xf32>
    %cst_17 = arith.constant 1.000000e+00 : f32
    %42 = vector.broadcast %cst_17 : f32 to vector<64x16xf32>
    %43 = arith.addf %42, %41 : vector<64x16xf32>
    %44 = arith.mulf %38, %43 : vector<64x16xf32>
    %45 = arith.truncf %44 : vector<64x16xf32> to vector<64x16xbf16>
    %c0_18 = arith.constant 0 : index
    %c0_19 = arith.constant 0 : index
    %46 = vector.load %arg6[%c0_18, %c0_19] : memref<16x8xbf16, #tpu.memory_space<vmem>>, vector<16x8xbf16>
    %cst_20 = arith.constant dense<0.000000e+00> : vector<64x8xf32>
    %47 = tpu.matmul %45, %46, %cst_20 {dimension_numbers = #tpu.dot_dimension_numbers<[1], [0], [0], [1], [0, 0, 1, 1], [], []>} : vector<64x16xbf16>, vector<16x8xbf16>, vector<64x8xf32> -> vector<64x8xf32>
    %c0_21 = arith.constant 0 : index
    %c0_22 = arith.constant 0 : index
    %48 = vector.load %arg7[%c0_21, %c0_22] : memref<1x8xf32, #tpu.memory_space<vmem>>, vector<1x8xf32>
    %49 = vector.broadcast %48 : vector<1x8xf32> to vector<64x8xf32>
    %50 = arith.addf %47, %49 : vector<64x8xf32>
    %51 = vector.shape_cast %50 : vector<64x8xf32> to vector<2x32x8xf32>
    %52 = tpu.transpose %51, [0, 2, 1] : vector<2x32x8xf32> -> vector<2x8x32xf32>
    %53 = arith.addf %0, %52 : vector<2x8x32xf32>
    %cst_23 = arith.constant dense<0.000000e+00> : vector<2x8xf32>
    %54 = vector.multi_reduction <add>, %53, %cst_23 [2] : vector<2x8x32xf32> to vector<2x8xf32>
    %55 = vector.shape_cast %54 : vector<2x8xf32> to vector<2x8x1xf32>
    %cst_24 = arith.constant 3.200000e+01 : f32
    %56 = vector.broadcast %cst_24 : f32 to vector<2x8x1xf32>
    %57 = arith.divf %55, %56 : vector<2x8x1xf32>
    %58 = vector.broadcast %57 : vector<2x8x1xf32> to vector<2x8x32xf32>
    %59 = arith.subf %53, %58 : vector<2x8x32xf32>
    %60 = vector.broadcast %57 : vector<2x8x1xf32> to vector<2x8x32xf32>
    %61 = arith.subf %53, %60 : vector<2x8x32xf32>
    %62 = arith.mulf %59, %61 : vector<2x8x32xf32>
    %cst_25 = arith.constant dense<0.000000e+00> : vector<2x8xf32>
    %63 = vector.multi_reduction <add>, %62, %cst_25 [2] : vector<2x8x32xf32> to vector<2x8xf32>
    %64 = vector.shape_cast %63 : vector<2x8xf32> to vector<2x8x1xf32>
    %cst_26 = arith.constant 3.200000e+01 : f32
    %65 = vector.broadcast %cst_26 : f32 to vector<2x8x1xf32>
    %66 = arith.divf %64, %65 : vector<2x8x1xf32>
    %67 = vector.broadcast %57 : vector<2x8x1xf32> to vector<2x8x32xf32>
    %68 = arith.subf %53, %67 : vector<2x8x32xf32>
    %cst_27 = arith.constant 9.99999974E-6 : f32
    %69 = vector.broadcast %cst_27 : f32 to vector<2x8x1xf32>
    %70 = arith.addf %66, %69 : vector<2x8x1xf32>
    %71 = math.rsqrt %70 : vector<2x8x1xf32>
    %72 = vector.broadcast %71 : vector<2x8x1xf32> to vector<2x8x32xf32>
    %73 = arith.mulf %68, %72 : vector<2x8x32xf32>
    %c0_28 = arith.constant 0 : index
    %c0_29 = arith.constant 0 : index
    %74 = vector.load %arg8[%c0_28, %c0_29] : memref<1x32xf32, #tpu.memory_space<vmem>>, vector<1x32xf32>
    %75 = vector.shape_cast %74 : vector<1x32xf32> to vector<1x1x32xf32>
    %76 = vector.broadcast %75 : vector<1x1x32xf32> to vector<2x8x32xf32>
    %77 = arith.mulf %73, %76 : vector<2x8x32xf32>
    %c0_30 = arith.constant 0 : index
    %c0_31 = arith.constant 0 : index
    %78 = vector.load %arg9[%c0_30, %c0_31] : memref<1x32xf32, #tpu.memory_space<vmem>>, vector<1x32xf32>
    %79 = vector.shape_cast %78 : vector<1x32xf32> to vector<1x1x32xf32>
    %80 = vector.broadcast %79 : vector<1x1x32xf32> to vector<2x8x32xf32>
    %81 = arith.addf %77, %80 : vector<2x8x32xf32>
    %82 = vector.shape_cast %81 : vector<2x8x32xf32> to vector<16x32xf32>
    %83 = arith.truncf %82 : vector<16x32xf32> to vector<16x32xbf16>
    %84 = vector.shape_cast %53 : vector<2x8x32xf32> to vector<16x32xf32>
    %c0_32 = arith.constant 0 : index
    %c0_33 = arith.constant 0 : index
    %85 = vector.load %arg13[%c0_32, %c0_33] : memref<1x32xf32, #tpu.memory_space<vmem>>, vector<1x32xf32>
    %86 = vector.broadcast %85 : vector<1x32xf32> to vector<16x32xf32>
    %87 = arith.addf %84, %86 : vector<16x32xf32>
    %c0_34 = arith.constant 0 : index
    %c0_35 = arith.constant 0 : index
    %88 = vector.load %arg10[%c0_34, %c0_35] : memref<32x64xbf16, #tpu.memory_space<vmem>>, vector<32x64xbf16>
    %cst_36 = arith.constant dense<0.000000e+00> : vector<16x64xf32>
    %89 = tpu.matmul %83, %88, %cst_36 {dimension_numbers = #tpu.dot_dimension_numbers<[1], [0], [0], [1], [0, 0, 1, 1], [], []>} : vector<16x32xbf16>, vector<32x64xbf16>, vector<16x64xf32> -> vector<16x64xf32>
    %c0_37 = arith.constant 0 : index
    %c0_38 = arith.constant 0 : index
    %90 = vector.load %arg11[%c0_37, %c0_38] : memref<1x64xf32, #tpu.memory_space<vmem>>, vector<1x64xf32>
    %91 = vector.broadcast %90 : vector<1x64xf32> to vector<16x64xf32>
    %92 = arith.addf %89, %91 : vector<16x64xf32>
    %cst_39 = arith.constant 5.000000e-01 : f32
    %93 = vector.broadcast %cst_39 : f32 to vector<16x64xf32>
    %94 = arith.mulf %93, %92 : vector<16x64xf32>
    %cst_40 = arith.constant 0.707106769 : f32
    %95 = vector.broadcast %cst_40 : f32 to vector<16x64xf32>
    %96 = arith.mulf %92, %95 : vector<16x64xf32>
    %97 = math.erf %96 : vector<16x64xf32>
    %cst_41 = arith.constant 1.000000e+00 : f32
    %98 = vector.broadcast %cst_41 : f32 to vector<16x64xf32>
    %99 = arith.addf %98, %97 : vector<16x64xf32>
    %100 = arith.mulf %94, %99 : vector<16x64xf32>
    %101 = arith.truncf %100 : vector<16x64xf32> to vector<16x64xbf16>
    %c0_42 = arith.constant 0 : index
    %c0_43 = arith.constant 0 : index
    %102 = vector.load %arg12[%c0_42, %c0_43] : memref<64x32xbf16, #tpu.memory_space<vmem>>, vector<64x32xbf16>
    %cst_44 = arith.constant dense<0.000000e+00> : vector<16x32xf32>
    %103 = tpu.matmul %101, %102, %cst_44 {dimension_numbers = #tpu.dot_dimension_numbers<[1], [0], [0], [1], [0, 0, 1, 1], [], []>} : vector<16x64xbf16>, vector<64x32xbf16>, vector<16x32xf32> -> vector<16x32xf32>
    %104 = arith.addf %87, %103 : vector<16x32xf32>
    %105 = vector.shape_cast %104 : vector<16x32xf32> to vector<2x8x32xf32>
    %c0_45 = arith.constant 0 : index
    %c0_46 = arith.constant 0 : index
    %c0_47 = arith.constant 0 : index
    %106 = vector.load %arg14[%c0_45, %c0_46, %c0_47] : memref<2x8x32xf32, #tpu.memory_space<vmem>>, vector<2x8x32xf32>
    tpu.vector_store %arg14[%c0_45, %c0_46, %c0_47], %105 {strides = array<i32>} : memref<2x8x32xf32, #tpu.memory_space<vmem>>, vector<2x8x32xf32>,
    return
  }
  func.func @transform_0(%arg0: i32) -> (i32, i32, i32) {
    %c0_i32 = arith.constant 0 : i32
    %c0_i32_0 = arith.constant 0 : i32
    %c0_i32_1 = arith.constant 0 : i32
    return %arg0, %c0_i32, %c0_i32_0 : i32, i32, i32
  }
  func.func @transform_1(%arg0: i32) -> (i32, i32) {
    %c0_i32 = arith.constant 0 : i32
    %c0_i32_0 = arith.constant 0 : i32
    %c0_i32_1 = arith.constant 0 : i32
    return %c0_i32, %c0_i32_0 : i32, i32
  }
  func.func @transform_2(%arg0: i32) -> (i32, i32) {
    %c0_i32 = arith.constant 0 : i32
    %c0_i32_0 = arith.constant 0 : i32
    %c0_i32_1 = arith.constant 0 : i32
    return %c0_i32, %c0_i32_0 : i32, i32
  }
  func.func @transform_3(%arg0: i32) -> (i32, i32) {
    %c0_i32 = arith.constant 0 : i32
    %c0_i32_0 = arith.constant 0 : i32
    %c0_i32_1 = arith.constant 0 : i32
    return %c0_i32, %c0_i32_0 : i32, i32
  }
  func.func @transform_4(%arg0: i32) -> (i32, i32) {
    %c0_i32 = arith.constant 0 : i32
    %c0_i32_0 = arith.constant 0 : i32
    %c0_i32_1 = arith.constant 0 : i32
    return %c0_i32, %c0_i32_0 : i32, i32
  }
  func.func @transform_5(%arg0: i32) -> (i32, i32) {
    %c0_i32 = arith.constant 0 : i32
    %c0_i32_0 = arith.constant 0 : i32
    %c0_i32_1 = arith.constant 0 : i32
    return %c0_i32, %c0_i32_0 : i32, i32
  }
  func.func @transform_6(%arg0: i32) -> (i32, i32) {
    %c0_i32 = arith.constant 0 : i32
    %c0_i32_0 = arith.constant 0 : i32
    %c0_i32_1 = arith.constant 0 : i32
    return %c0_i32, %c0_i32_0 : i32, i32
  }
  func.func @transform_7(%arg0: i32) -> (i32, i32) {
    %c0_i32 = arith.constant 0 : i32
    %c0_i32_0 = arith.constant 0 : i32
    %c0_i32_1 = arith.constant 0 : i32
    return %c0_i32, %c0_i32_0 : i32, i32
  }
  func.func @transform_8(%arg0: i32) -> (i32, i32) {
    %c0_i32 = arith.constant 0 : i32
    %c0_i32_0 = arith.constant 0 : i32
    %c0_i32_1 = arith.constant 0 : i32
    return %c0_i32, %c0_i32_0 : i32, i32
  }
  func.func @transform_9(%arg0: i32) -> (i32, i32) {
    %c0_i32 = arith.constant 0 : i32
    %c0_i32_0 = arith.constant 0 : i32
    %c0_i32_1 = arith.constant 0 : i32
    return %c0_i32, %c0_i32_0 : i32, i32
  }
  func.func @transform_10(%arg0: i32) -> (i32, i32) {
    %c0_i32 = arith.constant 0 : i32
    %c0_i32_0 = arith.constant 0 : i32
    %c0_i32_1 = arith.constant 0 : i32
    return %c0_i32, %c0_i32_0 : i32, i32
  }
  func.func @transform_11(%arg0: i32) -> (i32, i32) {
    %c0_i32 = arith.constant 0 : i32
    %c0_i32_0 = arith.constant 0 : i32
    %c0_i32_1 = arith.constant 0 : i32
    return %c0_i32, %c0_i32_0 : i32, i32
  }
  func.func @transform_12(%arg0: i32) -> (i32, i32) {
    %c0_i32 = arith.constant 0 : i32
    %c0_i32_0 = arith.constant 0 : i32
    %c0_i32_1 = arith.constant 0 : i32
    return %c0_i32, %c0_i32_0 : i32, i32
  }
  func.func @transform_13(%arg0: i32) -> (i32, i32, i32) {
    %c0_i32 = arith.constant 0 : i32
    %c0_i32_0 = arith.constant 0 : i32
    %c0_i32_1 = arith.constant 0 : i32
    return %arg0, %c0_i32, %c0_i32_0 : i32, i32, i32
  }
}

</mosaic_0001>

<llo_original>
// kernel: _mixer_block_call.1
$region0: #{_mixer_block_call.1}
  #allocation0 [shape = 'u32[]', space=smem, size = 0x4, offset = 0x4, fixed_abs, tag = 'smem constant byte address 0x4 - core index']
  #allocation1 [shape = 'u32[144,128]{1,0:T(1,128)}', space=vmem, size = 0x12000, scoped, tag = 'internal scratch']
  %s0 = inlined_call_operand.vmem [shape: f32[4,8,32], index: 0, kind: input, shape index: {}]
  %s1 = inlined_call_operand.vmem [shape: f32[1,32], index: 1, kind: input, shape index: {}]
  %s2 = inlined_call_operand.vmem [shape: f32[1,32], index: 2, kind: input, shape index: {}]
  %s3 = inlined_call_operand.vmem [shape: bf16[8,16], index: 3, kind: input, shape index: {}]
  %s4 = inlined_call_operand.vmem [shape: f32[1,16], index: 4, kind: input, shape index: {}]
  %s5 = inlined_call_operand.vmem [shape: bf16[16,8], index: 5, kind: input, shape index: {}]
  %s6 = inlined_call_operand.vmem [shape: f32[1,8], index: 6, kind: input, shape index: {}]
  %s7 = inlined_call_operand.vmem [shape: f32[1,32], index: 7, kind: input, shape index: {}]
  %s8 = inlined_call_operand.vmem [shape: f32[1,32], index: 8, kind: input, shape index: {}]
  %s9 = inlined_call_operand.vmem [shape: bf16[32,64], index: 9, kind: input, shape index: {}]
  %s10 = inlined_call_operand.vmem [shape: f32[1,64], index: 10, kind: input, shape index: {}]
  %s11 = inlined_call_operand.vmem [shape: bf16[64,32], index: 11, kind: input, shape index: {}]
  %s12 = inlined_call_operand.vmem [shape: f32[1,32], index: 12, kind: input, shape index: {}]
  %s13 = inlined_call_operand.hbm [shape: f32[4,8,32], index: 13, kind: output, shape index: {}]
  %s14 = sld [smem:[#allocation0]]
  $region85: #{_mixer_block_call.1} parent=0
    _
  %s16 = ssub.s32 1, %s14
  %s17 = scalar_select 0, %s16, %s14
  $region1: #{_mixer_block_call.1} parent=0
    #allocation2 [shape = 'u8[16384]{0}', space=vmem, size = 0x4000, scoped, tag = 'output window, operand 0']
    #allocation3 [shape = 's32[2]{0}', space=sflag, size = 0x8, scoped, tag = 'scoped memory for _mixer_block_call.1']
    %18 = vsyncpa [#allocation3], 0
    %s19 = scalar_lea.sflag [#allocation3], 1
    %20 = vsyncpa %s19, 0
    loop: start=0, step=1, limit=4
    $region2: #{_mixer_block_call.1} parent=1 // loop_pre_header
      _
    $region3: #{_mixer_block_call.1} parent=1 // loop_header
      %s22 = sphi 0, %s26
      %p23 = scmp.ge.s32.totalorder %s22, 4
      %s32 = sphi 0, %s34
      %s35 = sphi 0, %s32
      %s36 = sphi 0, %s35
      %s52 = sphi 0, %s36
      %s56 = sphi 0, %s56
      %s58 = sphi 0, %s56
      %s59 = sphi 0, %s58
      %s73 = sphi 0, %s59
      %s77 = sphi 0, %s77
      %s79 = sphi 0, %s77
      %s80 = sphi 0, %s79
      %s94 = sphi 0, %s80
      %s98 = sphi 0, %s98
      %s100 = sphi 0, %s98
      %s101 = sphi 0, %s100
      %s115 = sphi 0, %s101
      %s119 = sphi 0, %s119
      %s121 = sphi 0, %s119
      %s122 = sphi 0, %s121
      %s136 = sphi 0, %s122
      %s140 = sphi 0, %s140
      %s142 = sphi 0, %s140
      %s143 = sphi 0, %s142
      %s157 = sphi 0, %s143
      %s161 = sphi 0, %s161
      %s163 = sphi 0, %s161
      %s164 = sphi 0, %s163
      %s178 = sphi 0, %s164
      %s182 = sphi 0, %s182
      %s184 = sphi 0, %s182
      %s185 = sphi 0, %s184
      %s199 = sphi 0, %s185
      %s203 = sphi 0, %s203
      %s205 = sphi 0, %s203
      %s206 = sphi 0, %s205
      %s220 = sphi 0, %s206
      %s224 = sphi 0, %s224
      %s226 = sphi 0, %s224
      %s227 = sphi 0, %s226
      %s241 = sphi 0, %s227
      %s245 = sphi 0, %s245
      %s247 = sphi 0, %s245
      %s248 = sphi 0, %s247
      %s262 = sphi 0, %s248
      %s266 = sphi 0, %s266
      %s268 = sphi 0, %s266
      %s269 = sphi 0, %s268
      %s283 = sphi 0, %s269
      %s287 = sphi 0, %s287
      %s289 = sphi 0, %s287
      %s290 = sphi 0, %s289
      %s304 = sphi 0, %s290
      %s310 = sphi 0, %s312
      %s313 = sphi 0, %s310
      %s314 = sphi 0, %s313
      %s330 = sphi 0, %s314
    $region4: #{_mixer_block_call.1} parent=1 // loop_header_branch
      %25 = sbr.rel (%p23) target = $region8
    $region5: #{_mixer_block_call.1} parent=1 // loop_body
      %s27 = ssub.s32 %s22, 1
      %s28 = ssub.s32 %s22, 2
      %s29 = sadd.s32 %s22, 1
      %s30 = ssub.s32 %s22, %s29
      %p31 = scmp.eq.s32.totalorder %s30, 0
      %s33 = sadd.s32 %s32, 1
      %s34 = scalar_select %p31, %s32, %s33
      %p37 = pneg %p31
      %p38 = scmp.eq.s32.totalorder %s22, 1
      %p39 = por %p37, %p38
      %p40 = scmp.ne.s32.totalorder %s32, %s35
      %p41 = scmp.eq.s32.totalorder %s22, 0
      %p42 = por %p40, %p41
      %p43 = scmp.ne.s32.totalorder %s32, %s35
      %p44 = scmp.eq.s32.totalorder %s27, 1
      %p45 = por %p43, %p44
      %p46 = scmp.ne.s32.totalorder %s35, %s36
      %p47 = scmp.eq.s32.totalorder %s27, 0
      %p48 = por %p46, %p47
      %p49 = scmp.ne.s32.totalorder %s35, %s36
      %p50 = scmp.eq.s32.totalorder %s28, 1
      %p51 = por %p49, %p50
      %p53 = scmp.ne.s32.totalorder %s36, %s52
      %p54 = scmp.eq.s32.totalorder %s28, 0
      %p55 = por %p53, %p54
      %s57 = sadd.s32 %s56, 1
      %p60 = scmp.eq.s32.totalorder %s22, 1
      %p61 = scmp.ne.s32.totalorder %s56, %s58
      %p62 = scmp.eq.s32.totalorder %s22, 0
      %p63 = por %p61, %p62
      %p64 = scmp.ne.s32.totalorder %s56, %s58
      %p65 = scmp.eq.s32.totalorder %s27, 1
      %p66 = por %p64, %p65
      %p67 = scmp.ne.s32.totalorder %s58, %s59
      %p68 = scmp.eq.s32.totalorder %s27, 0
      %p69 = por %p67, %p68
      %p70 = scmp.ne.s32.totalorder %s58, %s59
      %p71 = scmp.eq.s32.totalorder %s28, 1
      %p72 = por %p70, %p71
      %p74 = scmp.ne.s32.totalorder %s59, %s73
      %p75 = scmp.eq.s32.totalorder %s28, 0
      %p76 = por %p74, %p75
      %s78 = sadd.s32 %s77, 1
      %p81 = scmp.eq.s32.totalorder %s22, 1
      %p82 = scmp.ne.s32.totalorder %s77, %s79
      %p83 = scmp.eq.s32.totalorder %s22, 0
      %p84 = por %p82, %p83
      %p85 = scmp.ne.s32.totalorder %s77, %s79
      %p86 = scmp.eq.s32.totalorder %s27, 1
      %p87 = por %p85, %p86
      %p88 = scmp.ne.s32.totalorder %s79, %s80
      %p89 = scmp.eq.s32.totalorder %s27, 0
      %p90 = por %p88, %p89
      %p91 = scmp.ne.s32.totalorder %s79, %s80
      %p92 = scmp.eq.s32.totalorder %s28, 1
      %p93 = por %p91, %p92
      %p95 = scmp.ne.s32.totalorder %s80, %s94
      %p96 = scmp.eq.s32.totalorder %s28, 0
      %p97 = por %p95, %p96
      %s99 = sadd.s32 %s98, 1
      %p102 = scmp.eq.s32.totalorder %s22, 1
      %p103 = scmp.ne.s32.totalorder %s98, %s100
      %p104 = scmp.eq.s32.totalorder %s22, 0
      %p105 = por %p103, %p104
      %p106 = scmp.ne.s32.totalorder %s98, %s100
      %p107 = scmp.eq.s32.totalorder %s27, 1
      %p108 = por %p106, %p107
      %p109 = scmp.ne.s32.totalorder %s100, %s101
      %p110 = scmp.eq.s32.totalorder %s27, 0
      %p111 = por %p109, %p110
      %p112 = scmp.ne.s32.totalorder %s100, %s101
      %p113 = scmp.eq.s32.totalorder %s28, 1
      %p114 = por %p112, %p113
      %p116 = scmp.ne.s32.totalorder %s101, %s115
      %p117 = scmp.eq.s32.totalorder %s28, 0
      %p118 = por %p116, %p117
      %s120 = sadd.s32 %s119, 1
      %p123 = scmp.eq.s32.totalorder %s22, 1
      %p124 = scmp.ne.s32.totalorder %s119, %s121
      %p125 = scmp.eq.s32.totalorder %s22, 0
      %p126 = por %p124, %p125
      %p127 = scmp.ne.s32.totalorder %s119, %s121
      %p128 = scmp.eq.s32.totalorder %s27, 1
      %p129 = por %p127, %p128
      %p130 = scmp.ne.s32.totalorder %s121, %s122
      %p131 = scmp.eq.s32.totalorder %s27, 0
      %p132 = por %p130, %p131
      %p133 = scmp.ne.s32.totalorder %s121, %s122
      %p134 = scmp.eq.s32.totalorder %s28, 1
      %p135 = por %p133, %p134
      %p137 = scmp.ne.s32.totalorder %s122, %s136
      %p138 = scmp.eq.s32.totalorder %s28, 0
      %p139 = por %p137, %p138
      %s141 = sadd.s32 %s140, 1
      %p144 = scmp.eq.s32.totalorder %s22, 1
      %p145 = scmp.ne.s32.totalorder %s140, %s142
      %p146 = scmp.eq.s32.totalorder %s22, 0
      %p147 = por %p145, %p146
      %p148 = scmp.ne.s32.totalorder %s140, %s142
      %p149 = scmp.eq.s32.totalorder %s27, 1
      %p150 = por %p148, %p149
      %p151 = scmp.ne.s32.totalorder %s142, %s143
      %p152 = scmp.eq.s32.totalorder %s27, 0
      %p153 = por %p151, %p152
      %p154 = scmp.ne.s32.totalorder %s142, %s143
      %p155 = scmp.eq.s32.totalorder %s28, 1
      %p156 = por %p154, %p155
      %p158 = scmp.ne.s32.totalorder %s143, %s157
      %p159 = scmp.eq.s32.totalorder %s28, 0
      %p160 = por %p158, %p159
      %s162 = sadd.s32 %s161, 1
      %p165 = scmp.eq.s32.totalorder %s22, 1
      %p166 = scmp.ne.s32.totalorder %s161, %s163
      %p167 = scmp.eq.s32.totalorder %s22, 0
      %p168 = por %p166, %p167
      %p169 = scmp.ne.s32.totalorder %s161, %s163
      %p170 = scmp.eq.s32.totalorder %s27, 1
      %p171 = por %p169, %p170
      %p172 = scmp.ne.s32.totalorder %s163, %s164
      %p173 = scmp.eq.s32.totalorder %s27, 0
      %p174 = por %p172, %p173
      %p175 = scmp.ne.s32.totalorder %s163, %s164
      %p176 = scmp.eq.s32.totalorder %s28, 1
      %p177 = por %p175, %p176
      %p179 = scmp.ne.s32.totalorder %s164, %s178
      %p180 = scmp.eq.s32.totalorder %s28, 0
      %p181 = por %p179, %p180
      %s183 = sadd.s32 %s182, 1
      %p186 = scmp.eq.s32.totalorder %s22, 1
      %p187 = scmp.ne.s32.totalorder %s182, %s184
      %p188 = scmp.eq.s32.totalorder %s22, 0
      %p189 = por %p187, %p188
      %p190 = scmp.ne.s32.totalorder %s182, %s184
      %p191 = scmp.eq.s32.totalorder %s27, 1
      %p192 = por %p190, %p191
      %p193 = scmp.ne.s32.totalorder %s184, %s185
      %p194 = scmp.eq.s32.totalorder %s27, 0
      %p195 = por %p193, %p194
      %p196 = scmp.ne.s32.totalorder %s184, %s185
      %p197 = scmp.eq.s32.totalorder %s28, 1
      %p198 = por %p196, %p197
      %p200 = scmp.ne.s32.totalorder %s185, %s199
      %p201 = scmp.eq.s32.totalorder %s28, 0
      %p202 = por %p200, %p201
      %s204 = sadd.s32 %s203, 1
      %p207 = scmp.eq.s32.totalorder %s22, 1
      %p208 = scmp.ne.s32.totalorder %s203, %s205
      %p209 = scmp.eq.s32.totalorder %s22, 0
      %p210 = por %p208, %p209
      %p211 = scmp.ne.s32.totalorder %s203, %s205
      %p212 = scmp.eq.s32.totalorder %s27, 1
      %p213 = por %p211, %p212
      %p214 = scmp.ne.s32.totalorder %s205, %s206
      %p215 = scmp.eq.s32.totalorder %s27, 0
      %p216 = por %p214, %p215
      %p217 = scmp.ne.s32.totalorder %s205, %s206
      %p218 = scmp.eq.s32.totalorder %s28, 1
      %p219 = por %p217, %p218
      %p221 = scmp.ne.s32.totalorder %s206, %s220
      %p222 = scmp.eq.s32.totalorder %s28, 0
      %p223 = por %p221, %p222
      %s225 = sadd.s32 %s224, 1
      %p228 = scmp.eq.s32.totalorder %s22, 1
      %p229 = scmp.ne.s32.totalorder %s224, %s226
      %p230 = scmp.eq.s32.totalorder %s22, 0
      %p231 = por %p229, %p230
      %p232 = scmp.ne.s32.totalorder %s224, %s226
      %p233 = scmp.eq.s32.totalorder %s27, 1
      %p234 = por %p232, %p233
      %p235 = scmp.ne.s32.totalorder %s226, %s227
      %p236 = scmp.eq.s32.totalorder %s27, 0
      %p237 = por %p235, %p236
      %p238 = scmp.ne.s32.totalorder %s226, %s227
      %p239 = scmp.eq.s32.totalorder %s28, 1
      %p240 = por %p238, %p239
      %p242 = scmp.ne.s32.totalorder %s227, %s241
      %p243 = scmp.eq.s32.totalorder %s28, 0
      %p244 = por %p242, %p243
      %s246 = sadd.s32 %s245, 1
      %p249 = scmp.eq.s32.totalorder %s22, 1
      %p250 = scmp.ne.s32.totalorder %s245, %s247
      %p251 = scmp.eq.s32.totalorder %s22, 0
      %p252 = por %p250, %p251
      %p253 = scmp.ne.s32.totalorder %s245, %s247
      %p254 = scmp.eq.s32.totalorder %s27, 1
      %p255 = por %p253, %p254
      %p256 = scmp.ne.s32.totalorder %s247, %s248
      %p257 = scmp.eq.s32.totalorder %s27, 0
      %p258 = por %p256, %p257
      %p259 = scmp.ne.s32.totalorder %s247, %s248
      %p260 = scmp.eq.s32.totalorder %s28, 1
      %p261 = por %p259, %p260
      %p263 = scmp.ne.s32.totalorder %s248, %s262
      %p264 = scmp.eq.s32.totalorder %s28, 0
      %p265 = por %p263, %p264
      %s267 = sadd.s32 %s266, 1
      %p270 = scmp.eq.s32.totalorder %s22, 1
      %p271 = scmp.ne.s32.totalorder %s266, %s268
      %p272 = scmp.eq.s32.totalorder %s22, 0
      %p273 = por %p271, %p272
      %p274 = scmp.ne.s32.totalorder %s266, %s268
      %p275 = scmp.eq.s32.totalorder %s27, 1
      %p276 = por %p274, %p275
      %p277 = scmp.ne.s32.totalorder %s268, %s269
      %p278 = scmp.eq.s32.totalorder %s27, 0
      %p279 = por %p277, %p278
      %p280 = scmp.ne.s32.totalorder %s268, %s269
      %p281 = scmp.eq.s32.totalorder %s28, 1
      %p282 = por %p280, %p281
      %p284 = scmp.ne.s32.totalorder %s269, %s283
      %p285 = scmp.eq.s32.totalorder %s28, 0
      %p286 = por %p284, %p285
      %s288 = sadd.s32 %s287, 1
      %p291 = scmp.eq.s32.totalorder %s22, 1
      %p292 = scmp.ne.s32.totalorder %s287, %s289
      %p293 = scmp.eq.s32.totalorder %s22, 0
      %p294 = por %p292, %p293
      %p295 = scmp.ne.s32.totalorder %s287, %s289
      %p296 = scmp.eq.s32.totalorder %s27, 1
      %p297 = por %p295, %p296
      %p298 = scmp.ne.s32.totalorder %s289, %s290
      %p299 = scmp.eq.s32.totalorder %s27, 0
      %p300 = por %p298, %p299
      %p301 = scmp.ne.s32.totalorder %s289, %s290
      %p302 = scmp.eq.s32.totalorder %s28, 1
      %p303 = por %p301, %p302
      %p305 = scmp.ne.s32.totalorder %s290, %s304
      %p306 = scmp.eq.s32.totalorder %s28, 0
      %p307 = por %p305, %p306
      %s308 = ssub.s32 %s22, %s29
      %p309 = scmp.eq.s32.totalorder %s308, 0
      %s311 = sadd.s32 %s310, 1
      %s312 = scalar_select %p309, %s310, %s311
      %p315 = pneg %p309
      %p316 = scmp.eq.s32.totalorder %s22, 1
      %p317 = por %p315, %p316
      %p318 = scmp.ne.s32.totalorder %s310, %s313
      %p319 = scmp.eq.s32.totalorder %s22, 0
      %p320 = por %p318, %p319
      %p321 = scmp.ne.s32.totalorder %s310, %s313
      %p322 = scmp.eq.s32.totalorder %s27, 1
      %p323 = por %p321, %p322
      %p324 = scmp.ne.s32.totalorder %s313, %s314
      %p325 = scmp.eq.s32.totalorder %s27, 0
      %p326 = por %p324, %p325
      %p327 = scmp.ne.s32.totalorder %s313, %s314
      %p328 = scmp.eq.s32.totalorder %s28, 1
      %p329 = por %p327, %p328
      %p331 = scmp.ne.s32.totalorder %s314, %s330
      %p332 = scmp.eq.s32.totalorder %s28, 0
      %p333 = por %p331, %p332
      %p334 = scmp.le.s32.totalorder 1, %s22
      %p335 = scmp.lt.s32.totalorder %s22, 3
      %p336 = pnand %p334, %p335
      %p337 = pneg %p336
      // Predicated region
      $region9: #{_mixer_block_call.1} parent=5 // pred_check
        _
      $region10: #{_mixer_block_call.1} parent=5 // pred_check_branch
        %339 = sbr.rel (%p336) target = $region12
      $region11: #{_mixer_block_call.1} parent=5 // pred_region
        %s340 = ssub.s32 %s22, 1
        // Predicated region
        $region13: #{_mixer_block_call.1} parent=11 // pred_check
          %p341 = pneg %p69
        $region14: #{_mixer_block_call.1} parent=11 // pred_check_branch
          %343 = sbr.rel (%p341) target = $region16
        $region15: #{_mixer_block_call.1} parent=11 // pred_region
          _
        $region16: #{_mixer_block_call.1} parent=11 // pred_fallthru
          _
        // Predicated region
        $region17: #{_mixer_block_call.1} parent=11 // pred_check
          %p344 = pneg %p90
        $region18: #{_mixer_block_call.1} parent=11 // pred_check_branch
          %346 = sbr.rel (%p344) target = $region20
        $region19: #{_mixer_block_call.1} parent=11 // pred_region
          _
        $region20: #{_mixer_block_call.1} parent=11 // pred_fallthru
          _
        // Predicated region
        $region21: #{_mixer_block_call.1} parent=11 // pred_check
          %p347 = pneg %p111
        $region22: #{_mixer_block_call.1} parent=11 // pred_check_branch
          %349 = sbr.rel (%p347) target = $region24
        $region23: #{_mixer_block_call.1} parent=11 // pred_region
          _
        $region24: #{_mixer_block_call.1} parent=11 // pred_fallthru
          _
        // Predicated region
        $region25: #{_mixer_block_call.1} parent=11 // pred_check
          %p350 = pneg %p132
        $region26: #{_mixer_block_call.1} parent=11 // pred_check_branch
          %352 = sbr.rel (%p350) target = $region28
        $region27: #{_mixer_block_call.1} parent=11 // pred_region
          _
        $region28: #{_mixer_block_call.1} parent=11 // pred_fallthru
          _
        // Predicated region
        $region29: #{_mixer_block_call.1} parent=11 // pred_check
          %p353 = pneg %p153
        $region30: #{_mixer_block_call.1} parent=11 // pred_check_branch
          %355 = sbr.rel (%p353) target = $region32
        $region31: #{_mixer_block_call.1} parent=11 // pred_region
          _
        $region32: #{_mixer_block_call.1} parent=11 // pred_fallthru
          _
        // Predicated region
        $region33: #{_mixer_block_call.1} parent=11 // pred_check
          %p356 = pneg %p174
        $region34: #{_mixer_block_call.1} parent=11 // pred_check_branch
          %358 = sbr.rel (%p356) target = $region36
        $region35: #{_mixer_block_call.1} parent=11 // pred_region
          _
        $region36: #{_mixer_block_call.1} parent=11 // pred_fallthru
          _
        // Predicated region
        $region37: #{_mixer_block_call.1} parent=11 // pred_check
          %p359 = pneg %p195
        $region38: #{_mixer_block_call.1} parent=11 // pred_check_branch
          %361 = sbr.rel (%p359) target = $region40
        $region39: #{_mixer_block_call.1} parent=11 // pred_region
          _
        $region40: #{_mixer_block_call.1} parent=11 // pred_fallthru
          _
        // Predicated region
        $region41: #{_mixer_block_call.1} parent=11 // pred_check
          %p362 = pneg %p216
        $region42: #{_mixer_block_call.1} parent=11 // pred_check_branch
          %364 = sbr.rel (%p362) target = $region44
        $region43: #{_mixer_block_call.1} parent=11 // pred_region
          _
        $region44: #{_mixer_block_call.1} parent=11 // pred_fallthru
          _
        // Predicated region
        $region45: #{_mixer_block_call.1} parent=11 // pred_check
          %p365 = pneg %p237
        $region46: #{_mixer_block_call.1} parent=11 // pred_check_branch
          %367 = sbr.rel (%p365) target = $region48
        $region47: #{_mixer_block_call.1} parent=11 // pred_region
          _
        $region48: #{_mixer_block_call.1} parent=11 // pred_fallthru
          _
        // Predicated region
        $region49: #{_mixer_block_call.1} parent=11 // pred_check
          %p368 = pneg %p258
        $region50: #{_mixer_block_call.1} parent=11 // pred_check_branch
          %370 = sbr.rel (%p368) target = $region52
        $region51: #{_mixer_block_call.1} parent=11 // pred_region
          _
        $region52: #{_mixer_block_call.1} parent=11 // pred_fallthru
          _
        // Predicated region
        $region53: #{_mixer_block_call.1} parent=11 // pred_check
          %p371 = pneg %p279
        $region54: #{_mixer_block_call.1} parent=11 // pred_check_branch
          %373 = sbr.rel (%p371) target = $region56
        $region55: #{_mixer_block_call.1} parent=11 // pred_region
          _
        $region56: #{_mixer_block_call.1} parent=11 // pred_fallthru
          _
        // Predicated region
        $region57: #{_mixer_block_call.1} parent=11 // pred_check
          %p374 = pneg %p300
        $region58: #{_mixer_block_call.1} parent=11 // pred_check_branch
          %376 = sbr.rel (%p374) target = $region60
        $region59: #{_mixer_block_call.1} parent=11 // pred_region
          _
        $region60: #{_mixer_block_call.1} parent=11 // pred_fallthru
          _
      $region12: #{_mixer_block_call.1} parent=5 // pred_fallthru
        _
      %p377 = scmp.lt.s32.totalorder %s22, 2
      // Predicated region
      $region61: #{_mixer_block_call.1} parent=5 // pred_check
        %p378 = pneg %p377
      $region62: #{_mixer_block_call.1} parent=5 // pred_check_branch
        %380 = sbr.rel (%p378) target = $region64
      $region63: #{_mixer_block_call.1} parent=5 // pred_region
        // Predicated region
        $region65: #{_mixer_block_call.1} parent=63 // pred_check
          %p381 = pneg %p42
        $region66: #{_mixer_block_call.1} parent=63 // pred_check_branch
          %383 = sbr.rel (%p381) target = $region68
        $region67: #{_mixer_block_call.1} parent=63 // pred_region
          %s384 = smul.u32 2, %s22
          %p385 = scmp.lt.s32.totalorder %s384, 3
          %s386 = scalar_select %p385, %s384, 3
          %s387 = smul.addr %s386, 8
          %s388 = scalar_lea.vmem %s0, %s387
          %s389 = smul.u32 2, %s22
        $region68: #{_mixer_block_call.1} parent=63 // pred_fallthru
          _
      $region64: #{_mixer_block_call.1} parent=5 // pred_fallthru
        _
      %p390 = scmp.le.s32.totalorder 1, %s22
      %p391 = scmp.lt.s32.totalorder %s22, 3
      %p392 = pnand %p390, %p391
      %p393 = pneg %p392
      // Predicated region
      $region69: #{_mixer_block_call.1} parent=5 // pred_check
        _
      $region70: #{_mixer_block_call.1} parent=5 // pred_check_branch
        %395 = sbr.rel (%p392) target = $region72
      $region71: #{_mixer_block_call.1} parent=5 // pred_region
        %s396 = ssub.s32 %s22, 1
        %s397 = smul.u32 2, %s27
        %p398 = scmp.lt.s32.totalorder %s397, 3
        %s399 = scalar_select %p398, %s397, 3
        %s400 = smul.addr %s399, 8
        %s401 = scalar_lea.vmem %s0, %s400
        %p402 = pneg %p48
        %p403 = pneg %p45
        %p404 = pneg %p69
        %p405 = pneg %p66
        %p406 = pneg %p90
        %p407 = pneg %p87
        %p408 = pneg %p111
        %p409 = pneg %p108
        %p410 = pneg %p132
        %p411 = pneg %p129
        %p412 = pneg %p153
        %p413 = pneg %p150
        %p414 = pneg %p174
        %p415 = pneg %p171
        %p416 = pneg %p195
        %p417 = pneg %p192
        %p418 = pneg %p216
        %p419 = pneg %p213
        %p420 = pneg %p237
        %p421 = pneg %p234
        %p422 = pneg %p258
        %p423 = pneg %p255
        %p424 = pneg %p279
        %p425 = pneg %p276
        %p426 = pneg %p300
        %p427 = pneg %p297
        %p428 = pneg %p326
        %p429 = pneg %p323
        %s430 = sand.u32 %s313, 1
        %s431 = scalar_lea.sflag [#allocation3], %s430
        %s432 = sand.u32 %s313, 1
        %s433 = smul.addr %s432, 16
        %s434 = scalar_lea.vmem [#allocation2], %s433
        %s435 = smul.u32 2, %s27
        %p436 = scmp.lt.s32.totalorder %s435, 3
        %s437 = scalar_select %p436, %s435, 3
        %s438 = smul.addr %s437, 8
        %s439 = scalar_lea.vmem %s0, %s438
        %s440 = smul.u32 2, %s27
        %s441 = smul.u32 2, %s27
        %v443 = vld [vmem:[%s439] sm:$0xff]
        %v444 = vld [vmem:[%s439 + $0x8] sm:$0xff]
        %vm445 = vcmask 261120
        %v446 = vsel %vm445, %v443, 0.0
        %447 = vadd.xlane.f32.xlu0 %v446
        %v448 = vpop.xlane.xlu0 %447
        %v449 = vsel %vm445, %v444, 0.0
        %450 = vadd.xlane.f32.xlu0 %v449
        %v451 = vpop.xlane.xlu0 %450
        %v452 = vrcp.pop 32.0
        %v453 = vmul.f32 %v448, %v452
        %v454 = vmul.f32 %v451, %v452
        %v455 = vsub.f32 %v443, %v453
        %v456 = vsub.f32 %v444, %v454
        %v457 = vmul.f32 %v455, %v455
        %v458 = vmul.f32 %v456, %v456
        %v459 = vsel %vm445, %v457, 0.0
        %460 = vadd.xlane.f32.xlu0 %v459
        %v461 = vpop.xlane.xlu0 %460
        %v462 = vsel %vm445, %v458, 0.0
        %463 = vadd.xlane.f32.xlu0 %v462
        %v464 = vpop.xlane.xlu0 %463
        %v465 = vmul.f32 %v461, %v452
        %v466 = vmul.f32 %v464, %v452
        %v467 = vadd.f32 %v465, 1e-05
        %v468 = vadd.f32 %v466, 1e-05
        %v469 = vrsqrt.pop %v467
        %v470 = vrsqrt.pop %v468
        %v471 = vmul.f32 %v455, %v469
        %v472 = vmul.f32 %v456, %v470
        %v473 = vld [vmem:[%s1] sm:$0x1]
        %v475 = vlaneseq
        %v476 = vshrl.u32 %v475, 7
        %v477 = vsub.s32 0, %v476
        %v478 = vrot.slane %v473, %v477
        %v480 = vmul.f32 %v471, %v478
        %v481 = vmul.f32 %v472, %v478
        %v482 = vld [vmem:[%s2] sm:$0x1]
        %v484 = vlaneseq
        %v485 = vshrl.u32 %v484, 7
        %v486 = vsub.s32 0, %v485
        %v487 = vrot.slane %v482, %v486
        %v489 = vadd.f32 %v480, %v487
        %v490 = vadd.f32 %v481, %v487
        %491 = vxpose.xlu0.b32.start [1/16] %v489, 128
        %492 = vxpose.xlu0.b32.cont [2/16] 0.0, 128
        %493 = vxpose.xlu0.b32.cont [3/16] 0.0, 128
        %494 = vxpose.xlu0.b32.cont [4/16] 0.0, 128
        %495 = vxpose.xlu0.b32.cont [5/16] 0.0, 128
        %496 = vxpose.xlu0.b32.cont [6/16] 0.0, 128
        %497 = vxpose.xlu0.b32.cont [7/16] 0.0, 128
        %498 = vxpose.xlu0.b32.cont [8/16] 0.0, 128
        %499 = vxpose.xlu0.b32.cont [9/16] 0.0, 128
        %500 = vxpose.xlu0.b32.cont [10/16] 0.0, 128
        %501 = vxpose.xlu0.b32.cont [11/16] 0.0, 128
        %502 = vxpose.xlu0.b32.cont [12/16] 0.0, 128
        %503 = vxpose.xlu0.b32.cont [13/16] 0.0, 128
        %504 = vxpose.xlu0.b32.cont [14/16] 0.0, 128
        %505 = vxpose.xlu0.b32.cont [15/16] 0.0, 128
        %506 = vxpose.xlu0.b32.end [16/16] 0.0, 128
        %v507 = vpop.trf.xlu0
        %v508 = vpop.trf.xlu0
        %v509 = vpop.trf.xlu0
        %v510 = vpop.trf.xlu0
        %v511 = vpop.trf.xlu0
        %v512 = vpop.trf.xlu0
        %v513 = vpop.trf.xlu0
        %v514 = vpop.trf.xlu0
        %v515 = vpop.trf.xlu0
        %v516 = vpop.trf.xlu0
        %v517 = vpop.trf.xlu0
        %v518 = vpop.trf.xlu0
        %v519 = vpop.trf.xlu0
        %v520 = vpop.trf.xlu0
        %v521 = vpop.trf.xlu0
        %v522 = vpop.trf.xlu0
        %523 = vxpose.xlu0.b32.start [1/16] %v490, 128
        %524 = vxpose.xlu0.b32.cont [2/16] 0.0, 128
        %525 = vxpose.xlu0.b32.cont [3/16] 0.0, 128
        %526 = vxpose.xlu0.b32.cont [4/16] 0.0, 128
        %527 = vxpose.xlu0.b32.cont [5/16] 0.0, 128
        %528 = vxpose.xlu0.b32.cont [6/16] 0.0, 128
        %529 = vxpose.xlu0.b32.cont [7/16] 0.0, 128
        %530 = vxpose.xlu0.b32.cont [8/16] 0.0, 128
        %531 = vxpose.xlu0.b32.cont [9/16] 0.0, 128
        %532 = vxpose.xlu0.b32.cont [10/16] 0.0, 128
        %533 = vxpose.xlu0.b32.cont [11/16] 0.0, 128
        %534 = vxpose.xlu0.b32.cont [12/16] 0.0, 128
        %535 = vxpose.xlu0.b32.cont [13/16] 0.0, 128
        %536 = vxpose.xlu0.b32.cont [14/16] 0.0, 128
        %537 = vxpose.xlu0.b32.cont [15/16] 0.0, 128
        %538 = vxpose.xlu0.b32.end [16/16] 0.0, 128
        %v539 = vpop.trf.xlu0
        %v540 = vpop.trf.xlu0
        %v541 = vpop.trf.xlu0
        %v542 = vpop.trf.xlu0
        %v543 = vpop.trf.xlu0
        %v544 = vpop.trf.xlu0
        %v545 = vpop.trf.xlu0
        %v546 = vpop.trf.xlu0
        %v547 = vpop.trf.xlu0
        %v548 = vpop.trf.xlu0
        %v549 = vpop.trf.xlu0
        %v550 = vpop.trf.xlu0
        %v551 = vpop.trf.xlu0
        %v552 = vpop.trf.xlu0
        %v553 = vpop.trf.xlu0
        %v554 = vpop.trf.xlu0
        %v555 = vpack.c.bf16 %v508, %v507
        %v556 = vpack.c.bf16 %v510, %v509
        %v557 = vpack.c.bf16 %v540, %v539
        %v558 = vpack.c.bf16 %v542, %v541
        %v559 = vld [vmem:[%s3] sm:$0xf]
        %v560 = vld [vmem:[%s4] sm:$0x1]
        %v562 = vlaneseq
        %v563 = vshrl.u32 %v562, 7
        %v564 = vsub.s32 0, %v563
        %v565 = vrot.slane %v560, %v564
        %vm567 = vcmask 64512
        %v569 = vsel %vm567, %v555, 0
        %v572 = vsel %vm567, %v556, 0
        %v575 = vsel %vm567, %v557, 0
        %v578 = vsel %vm567, %v558, 0
        %vm580 = vcmask 1043456
        %v582 = vsel %vm580, %v559, 0
        %584 = vmatprep.subr.bf16.mxu0 0
        %585 = vmatpush1.bf16.msra.mxu0 %v582
        %586 = vmatprep.subr.bf16.mxu0 0
        %587 = vmatpush1.bf16.msra.mxu0 0
        %588 = vmatprep.subr.bf16.mxu0 0
        %589 = vmatpush1.bf16.msra.mxu0 0
        %590 = vmatprep.subr.bf16.mxu0 0
        %591 = vmatpush1.bf16.msra.mxu0 0
        %592 = vmatprep.subr.bf16.mxu0 0
        %593 = vmatpush1.bf16.msra.mxu0 0
        %594 = vmatprep.subr.bf16.mxu0 0
        %595 = vmatpush1.bf16.msra.mxu0 0
        %596 = vmatprep.subr.bf16.mxu0 0
        %597 = vmatpush1.bf16.msra.mxu0 0
        %598 = vmatprep.subr.bf16.mxu0 0
        %599 = vmatpush1.bf16.msra.mxu0 0
        %600 = vmatprep.subr.bf16.mxu0 0
        %601 = vmatpush1.bf16.msra.mxu0 0
        %602 = vmatprep.subr.bf16.mxu0 0
        %603 = vmatpush1.bf16.msra.mxu0 0
        %604 = vmatprep.subr.bf16.mxu0 0
        %605 = vmatpush1.bf16.msra.mxu0 0
        %606 = vmatprep.subr.bf16.mxu0 0
        %607 = vmatpush1.bf16.msra.mxu0 0
        %608 = vmatprep.subr.bf16.mxu0 0
        %609 = vmatpush1.bf16.msra.mxu0 0
        %610 = vmatprep.subr.bf16.mxu0 0
        %611 = vmatpush1.bf16.msra.mxu0 0
        %612 = vmatprep.subr.bf16.mxu0 0
        %613 = vmatpush1.bf16.msra.mxu0 0
        %614 = vmatprep.subr.bf16.mxu0 0
        %615 = vmatpush1.bf16.msra.mxu0 0
        %616 = vmatprep.mubr.bf16.mxu0 0
        %617 = vmatmul.mubr.bf16.gmra.mrb[0].mxu0 %v569
        %v618 = vpop.f32.mrb[0].mxu0
        %v619 = vadd.f32 %v565, %v618
        %v620 = vpop.f32.mrb[0].mxu0
        %v621 = vpop.f32.mrb[0].mxu0
        %v622 = vadd.f32 %v565, %v621
        %v623 = vpop.f32.mrb[0].mxu0
        %624 = vmatprep.mubr.bf16.mxu0 0
        %625 = vmatmul.mubr.bf16.gmra.mrb[0].mxu0 %v572
        %v626 = vpop.f32.mrb[0].mxu0
        %v627 = vadd.f32 %v565, %v626
        %v628 = vpop.f32.mrb[0].mxu0
        %v629 = vpop.f32.mrb[0].mxu0
        %v630 = vadd.f32 %v565, %v629
        %v631 = vpop.f32.mrb[0].mxu0
        %632 = vmatprep.mubr.bf16.mxu0 0
        %633 = vmatmul.mubr.bf16.gmra.mrb[0].mxu0 %v575
        %v634 = vpop.f32.mrb[0].mxu0
        %v635 = vadd.f32 %v565, %v634
        %v636 = vpop.f32.mrb[0].mxu0
        %v637 = vpop.f32.mrb[0].mxu0
        %v638 = vadd.f32 %v565, %v637
        %v639 = vpop.f32.mrb[0].mxu0
        %640 = vmatprep.mubr.bf16.mxu0 0
        %641 = vmatmul.mubr.bf16.gmra.mrb[0].mxu0 %v578
        %v642 = vpop.f32.mrb[0].mxu0
        %v643 = vadd.f32 %v565, %v642
        %v644 = vpop.f32.mrb[0].mxu0
        %v645 = vpop.f32.mrb[0].mxu0
        %v646 = vadd.f32 %v565, %v645
        %v647 = vpop.f32.mrb[0].mxu0
        %648 = vdwg.mxu0
        %v649 = vmul.f32 %v619, 0.5
        %v650 = vmul.f32 %v622, 0.5
        %v651 = vmul.f32 %v627, 0.5
        %v652 = vmul.f32 %v630, 0.5
        %v653 = vmul.f32 %v635, 0.5
        %v654 = vmul.f32 %v638, 0.5
        %v655 = vmul.f32 %v643, 0.5
        %v656 = vmul.f32 %v646, 0.5
        %v657 = vmul.f32 %v619, 0.70710677
        %v658 = vmul.f32 %v622, 0.70710677
        %v659 = vmul.f32 %v627, 0.70710677
        %v660 = vmul.f32 %v630, 0.70710677
        %v661 = vmul.f32 %v635, 0.70710677
        %v662 = vmul.f32 %v638, 0.70710677
        %v663 = vmul.f32 %v643, 0.70710677
        %v664 = vmul.f32 %v646, 0.70710677
        %v665 = verf.f32.pop %v657
        %v666 = verf.f32.pop %v658
        %v667 = verf.f32.pop %v659
        %v668 = verf.f32.pop %v660
        %v669 = verf.f32.pop %v661
        %v670 = verf.f32.pop %v662
        %v671 = verf.f32.pop %v663
        %v672 = verf.f32.pop %v664
        %v673 = vadd.f32 %v665, 1.0
        %v674 = vadd.f32 %v666, 1.0
        %v675 = vadd.f32 %v667, 1.0
        %v676 = vadd.f32 %v668, 1.0
        %v677 = vadd.f32 %v669, 1.0
        %v678 = vadd.f32 %v670, 1.0
        %v679 = vadd.f32 %v671, 1.0
        %v680 = vadd.f32 %v672, 1.0
        %v681 = vmul.f32 %v649, %v673
        %v682 = vmul.f32 %v650, %v674
        %v683 = vmul.f32 %v651, %v675
        %v684 = vmul.f32 %v652, %v676
        %v685 = vmul.f32 %v653, %v677
        %v686 = vmul.f32 %v654, %v678
        %v687 = vmul.f32 %v655, %v679
        %v688 = vmul.f32 %v656, %v680
        %v689 = vpack.c.bf16 %v682, %v681
        %v690 = vpack.c.bf16 %v684, %v683
        %v691 = vpack.c.bf16 %v686, %v685
        %v692 = vpack.c.bf16 %v688, %v687
        %v693 = vld [vmem:[%s5] sm:$0xf]
        %v694 = vld [vmem:[%s5 + $0x4] sm:$0xf]
        %v695 = vld [vmem:[%s6] sm:$0x1]
        %v697 = vlaneseq
        %v698 = vshrl.u32 %v697, 7
        %v699 = vsub.s32 0, %v698
        %v700 = vrot.slane %v695, %v699
        %v704 = vunpack.c.l.b16 %v693
        %v705 = vunpack.c.l.b16 %v694
        %v706 = vpack.c.b16 %v705, %v704
        %vm708 = vcmask 130048
        %v710 = vsel %vm708, %v689, 0
        %v713 = vsel %vm708, %v690, 0
        %v716 = vsel %vm708, %v691, 0
        %v719 = vsel %vm708, %v692, 0
        %721 = vmatprep.subr.bf16.mxu0 0
        %722 = vmatpush1.bf16.msra.mxu0 %v706
        %723 = vmatprep.subr.bf16.mxu0 0
        %724 = vmatpush1.bf16.msra.mxu0 0
        %725 = vmatprep.subr.bf16.mxu0 0
        %726 = vmatpush1.bf16.msra.mxu0 0
        %727 = vmatprep.subr.bf16.mxu0 0
        %728 = vmatpush1.bf16.msra.mxu0 0
        %729 = vmatprep.subr.bf16.mxu0 0
        %730 = vmatpush1.bf16.msra.mxu0 0
        %731 = vmatprep.subr.bf16.mxu0 0
        %732 = vmatpush1.bf16.msra.mxu0 0
        %733 = vmatprep.subr.bf16.mxu0 0
        %734 = vmatpush1.bf16.msra.mxu0 0
        %735 = vmatprep.subr.bf16.mxu0 0
        %736 = vmatpush1.bf16.msra.mxu0 0
        %737 = vmatprep.subr.bf16.mxu0 0
        %738 = vmatpush1.bf16.msra.mxu0 0
        %739 = vmatprep.subr.bf16.mxu0 0
        %740 = vmatpush1.bf16.msra.mxu0 0
        %741 = vmatprep.subr.bf16.mxu0 0
        %742 = vmatpush1.bf16.msra.mxu0 0
        %743 = vmatprep.subr.bf16.mxu0 0
        %744 = vmatpush1.bf16.msra.mxu0 0
        %745 = vmatprep.subr.bf16.mxu0 0
        %746 = vmatpush1.bf16.msra.mxu0 0
        %747 = vmatprep.subr.bf16.mxu0 0
        %748 = vmatpush1.bf16.msra.mxu0 0
        %749 = vmatprep.subr.bf16.mxu0 0
        %750 = vmatpush1.bf16.msra.mxu0 0
        %751 = vmatprep.subr.bf16.mxu0 0
        %752 = vmatpush1.bf16.msra.mxu0 0
        %753 = vmatprep.mubr.bf16.mxu0 0
        %754 = vmatmul.mubr.bf16.gmra.mrb[0].mxu0 %v710
        %v755 = vpop.f32.mrb[0].mxu0
        %v756 = vadd.f32 %v700, %v755
        %v757 = vpop.f32.mrb[0].mxu0
        %v758 = vpop.f32.mrb[0].mxu0
        %v759 = vadd.f32 %v700, %v758
        %v760 = vpop.f32.mrb[0].mxu0
        %761 = vmatprep.mubr.bf16.mxu0 0
        %762 = vmatmul.mubr.bf16.gmra.mrb[0].mxu0 %v713
        %v763 = vpop.f32.mrb[0].mxu0
        %v764 = vadd.f32 %v700, %v763
        %v765 = vpop.f32.mrb[0].mxu0
        %v766 = vpop.f32.mrb[0].mxu0
        %v767 = vadd.f32 %v700, %v766
        %v768 = vpop.f32.mrb[0].mxu0
        %769 = vmatprep.mubr.bf16.mxu0 0
        %770 = vmatmul.mubr.bf16.gmra.mrb[0].mxu0 %v716
        %v771 = vpop.f32.mrb[0].mxu0
        %v772 = vadd.f32 %v700, %v771
        %v773 = vpop.f32.mrb[0].mxu0
        %v774 = vpop.f32.mrb[0].mxu0
        %v775 = vadd.f32 %v700, %v774
        %v776 = vpop.f32.mrb[0].mxu0
        %777 = vmatprep.mubr.bf16.mxu0 0
        %778 = vmatmul.mubr.bf16.gmra.mrb[0].mxu0 %v719
        %v779 = vpop.f32.mrb[0].mxu0
        %v780 = vadd.f32 %v700, %v779
        %v781 = vpop.f32.mrb[0].mxu0
        %v782 = vpop.f32.mrb[0].mxu0
        %v783 = vadd.f32 %v700, %v782
        %v784 = vpop.f32.mrb[0].mxu0
        %785 = vdwg.mxu0
        %786 = vxpose.xlu0.b32.start [1/16] %v756, 128
        %787 = vxpose.xlu0.b32.cont [2/16] %v759, 128
        %788 = vxpose.xlu0.b32.cont [3/16] %v764, 128
        %789 = vxpose.xlu0.b32.cont [4/16] %v767, 128
        %790 = vxpose.xlu0.b32.cont [5/16] 0.0, 128
        %791 = vxpose.xlu0.b32.cont [6/16] 0.0, 128
        %792 = vxpose.xlu0.b32.cont [7/16] 0.0, 128
        %793 = vxpose.xlu0.b32.cont [8/16] 0.0, 128
        %794 = vxpose.xlu0.b32.cont [9/16] 0.0, 128
        %795 = vxpose.xlu0.b32.cont [10/16] 0.0, 128
        %796 = vxpose.xlu0.b32.cont [11/16] 0.0, 128
        %797 = vxpose.xlu0.b32.cont [12/16] 0.0, 128
        %798 = vxpose.xlu0.b32.cont [13/16] 0.0, 128
        %799 = vxpose.xlu0.b32.cont [14/16] 0.0, 128
        %800 = vxpose.xlu0.b32.cont [15/16] 0.0, 128
        %801 = vxpose.xlu0.b32.end [16/16] 0.0, 128
        %v802 = vpop.trf.xlu0
        %v803 = vpop.trf.xlu0
        %v804 = vpop.trf.xlu0
        %v805 = vpop.trf.xlu0
        %v806 = vpop.trf.xlu0
        %v807 = vpop.trf.xlu0
        %v808 = vpop.trf.xlu0
        %v809 = vpop.trf.xlu0
        %v810 = vpop.trf.xlu0
        %v811 = vpop.trf.xlu0
        %v812 = vpop.trf.xlu0
        %v813 = vpop.trf.xlu0
        %v814 = vpop.trf.xlu0
        %v815 = vpop.trf.xlu0
        %v816 = vpop.trf.xlu0
        %v817 = vpop.trf.xlu0
        %818 = vxpose.xlu0.b32.start [1/16] %v772, 128
        %819 = vxpose.xlu0.b32.cont [2/16] %v775, 128
        %820 = vxpose.xlu0.b32.cont [3/16] %v780, 128
        %821 = vxpose.xlu0.b32.cont [4/16] %v783, 128
        %822 = vxpose.xlu0.b32.cont [5/16] 0.0, 128
        %823 = vxpose.xlu0.b32.cont [6/16] 0.0, 128
        %824 = vxpose.xlu0.b32.cont [7/16] 0.0, 128
        %825 = vxpose.xlu0.b32.cont [8/16] 0.0, 128
        %826 = vxpose.xlu0.b32.cont [9/16] 0.0, 128
        %827 = vxpose.xlu0.b32.cont [10/16] 0.0, 128
        %828 = vxpose.xlu0.b32.cont [11/16] 0.0, 128
        %829 = vxpose.xlu0.b32.cont [12/16] 0.0, 128
        %830 = vxpose.xlu0.b32.cont [13/16] 0.0, 128
        %831 = vxpose.xlu0.b32.cont [14/16] 0.0, 128
        %832 = vxpose.xlu0.b32.cont [15/16] 0.0, 128
        %833 = vxpose.xlu0.b32.end [16/16] 0.0, 128
        %v834 = vpop.trf.xlu0
        %v835 = vpop.trf.xlu0
        %v836 = vpop.trf.xlu0
        %v837 = vpop.trf.xlu0
        %v838 = vpop.trf.xlu0
        %v839 = vpop.trf.xlu0
        %v840 = vpop.trf.xlu0
        %v841 = vpop.trf.xlu0
        %v842 = vpop.trf.xlu0
        %v843 = vpop.trf.xlu0
        %v844 = vpop.trf.xlu0
        %v845 = vpop.trf.xlu0
        %v846 = vpop.trf.xlu0
        %v847 = vpop.trf.xlu0
        %v848 = vpop.trf.xlu0
        %v849 = vpop.trf.xlu0
        %v850 = vadd.f32 %v443, %v802
        %v851 = vadd.f32 %v444, %v834
        %v852 = vsel %vm445, %v850, 0.0
        %853 = vadd.xlane.f32.xlu0 %v852
        %v854 = vpop.xlane.xlu0 %853
        %v855 = vsel %vm445, %v851, 0.0
        %856 = vadd.xlane.f32.xlu0 %v855
        %v857 = vpop.xlane.xlu0 %856
        %v858 = vmul.f32 %v854, %v452
        %v859 = vmul.f32 %v857, %v452
        %v860 = vsub.f32 %v850, %v858
        %v861 = vsub.f32 %v851, %v859
        %v862 = vmul.f32 %v860, %v860
        %v863 = vmul.f32 %v861, %v861
        %v864 = vsel %vm445, %v862, 0.0
        %865 = vadd.xlane.f32.xlu0 %v864
        %v866 = vpop.xlane.xlu0 %865
        %v867 = vsel %vm445, %v863, 0.0
        %868 = vadd.xlane.f32.xlu0 %v867
        %v869 = vpop.xlane.xlu0 %868
        %v870 = vmul.f32 %v866, %v452
        %v871 = vmul.f32 %v869, %v452
        %v872 = vadd.f32 %v870, 1e-05
        %v873 = vadd.f32 %v871, 1e-05
        %v874 = vrsqrt.pop %v872
        %v875 = vrsqrt.pop %v873
        %v876 = vmul.f32 %v860, %v874
        %v877 = vmul.f32 %v861, %v875
        %v878 = vld [vmem:[%s7] sm:$0x1]
        %v880 = vlaneseq
        %v881 = vshrl.u32 %v880, 7
        %v882 = vsub.s32 0, %v881
        %v883 = vrot.slane %v878, %v882
        %v885 = vmul.f32 %v876, %v883
        %v886 = vmul.f32 %v877, %v883
        %v887 = vld [vmem:[%s8] sm:$0x1]
        %v889 = vlaneseq
        %v890 = vshrl.u32 %v889, 7
        %v891 = vsub.s32 0, %v890
        %v892 = vrot.slane %v887, %v891
        %v894 = vadd.f32 %v885, %v892
        %v895 = vadd.f32 %v886, %v892
        %v896 = vpack.c.bf16 %v895, %v894
        %v897 = vld [vmem:[%s12] sm:$0x1]
        %v899 = vlaneseq
        %v900 = vshrl.u32 %v899, 7
        %v901 = vsub.s32 0, %v900
        %v902 = vrot.slane %v897, %v901
        %v904 = vadd.f32 %v850, %v902
        %v905 = vadd.f32 %v851, %v902
        %v906 = vld [vmem:[%s9] sm:$0xf]
        %v907 = vld [vmem:[%s9 + $0x4] sm:$0xf]
        %v908 = vld [vmem:[%s9 + $0x8] sm:$0xf]
        %v909 = vld [vmem:[%s9 + $0xc] sm:$0xf]
        %v910 = vld [vmem:[%s10] sm:$0x1]
        %v912 = vlaneseq
        %v913 = vshrl.u32 %v912, 7
        %v914 = vsub.s32 0, %v913
        %v915 = vrot.slane %v910, %v914
        %v921 = vunpack.c.l.b16 %v906
        %v922 = vunpack.c.l.b16 %v907
        %v923 = vunpack.c.l.b16 %v908
        %v924 = vunpack.c.l.b16 %v909
        %v925 = vpack.c.b16 %v922, %v921
        %v926 = vpack.c.b16 %v924, %v923
        %v930 = vsel %vm445, %v896, 0
        %932 = vmatprep.subr.bf16.mxu0 0
        %933 = vmatpush1.bf16.msra.mxu0 %v925
        %934 = vmatprep.subr.bf16.mxu0 0
        %935 = vmatpush1.bf16.msra.mxu0 %v926
        %936 = vmatprep.subr.bf16.mxu0 0
        %937 = vmatpush1.bf16.msra.mxu0 0
        %938 = vmatprep.subr.bf16.mxu0 0
        %939 = vmatpush1.bf16.msra.mxu0 0
        %940 = vmatprep.subr.bf16.mxu0 0
        %941 = vmatpush1.bf16.msra.mxu0 0
        %942 = vmatprep.subr.bf16.mxu0 0
        %943 = vmatpush1.bf16.msra.mxu0 0
        %944 = vmatprep.subr.bf16.mxu0 0
        %945 = vmatpush1.bf16.msra.mxu0 0
        %946 = vmatprep.subr.bf16.mxu0 0
        %947 = vmatpush1.bf16.msra.mxu0 0
        %948 = vmatprep.subr.bf16.mxu0 0
        %949 = vmatpush1.bf16.msra.mxu0 0
        %950 = vmatprep.subr.bf16.mxu0 0
        %951 = vmatpush1.bf16.msra.mxu0 0
        %952 = vmatprep.subr.bf16.mxu0 0
        %953 = vmatpush1.bf16.msra.mxu0 0
        %954 = vmatprep.subr.bf16.mxu0 0
        %955 = vmatpush1.bf16.msra.mxu0 0
        %956 = vmatprep.subr.bf16.mxu0 0
        %957 = vmatpush1.bf16.msra.mxu0 0
        %958 = vmatprep.subr.bf16.mxu0 0
        %959 = vmatpush1.bf16.msra.mxu0 0
        %960 = vmatprep.subr.bf16.mxu0 0
        %961 = vmatpush1.bf16.msra.mxu0 0
        %962 = vmatprep.subr.bf16.mxu0 0
        %963 = vmatpush1.bf16.msra.mxu0 0
        %964 = vmatprep.mubr.bf16.mxu0 0
        %965 = vmatmul.mubr.bf16.gmra.mrb[0].mxu0 %v930
        %v966 = vpop.f32.mrb[0].mxu0
        %v967 = vadd.f32 %v915, %v966
        %v968 = vpop.f32.mrb[0].mxu0
        %v969 = vpop.f32.mrb[0].mxu0
        %v970 = vadd.f32 %v915, %v969
        %v971 = vpop.f32.mrb[0].mxu0
        %972 = vdwg.mxu0
        %v973 = vmul.f32 %v967, 0.5
        %v974 = vmul.f32 %v970, 0.5
        %v975 = vmul.f32 %v967, 0.70710677
        %v976 = vmul.f32 %v970, 0.70710677
        %v977 = verf.f32.pop %v975
        %v978 = verf.f32.pop %v976
        %v979 = vadd.f32 %v977, 1.0
        %v980 = vadd.f32 %v978, 1.0
        %v981 = vmul.f32 %v973, %v979
        %v982 = vmul.f32 %v974, %v980
        %v983 = vpack.c.bf16 %v982, %v981
        %v984 = vld [vmem:[%s11] sm:$0xf]
        %v985 = vld [vmem:[%s11 + $0x4] sm:$0xf]
        %v986 = vld [vmem:[%s11 + $0x8] sm:$0xf]
        %v987 = vld [vmem:[%s11 + $0xc] sm:$0xf]
        %v988 = vld [vmem:[%s11 + $0x10] sm:$0xf]
        %v989 = vld [vmem:[%s11 + $0x14] sm:$0xf]
        %v990 = vld [vmem:[%s11 + $0x18] sm:$0xf]
        %v991 = vld [vmem:[%s11 + $0x1c] sm:$0xf]
        %v1000 = vunpack.c.l.b16 %v984
        %v1001 = vunpack.c.l.b16 %v985
        %v1002 = vunpack.c.l.b16 %v986
        %v1003 = vunpack.c.l.b16 %v987
        %v1004 = vunpack.c.l.b16 %v988
        %v1005 = vunpack.c.l.b16 %v989
        %v1006 = vunpack.c.l.b16 %v990
        %v1007 = vunpack.c.l.b16 %v991
        %v1008 = vpack.c.b16 %v1001, %v1000
        %v1009 = vpack.c.b16 %v1003, %v1002
        %v1010 = vpack.c.b16 %v1005, %v1004
        %v1011 = vpack.c.b16 %v1007, %v1006
        %vm1016 = vcmask 523264
        %v1018 = vsel %vm1016, %v983, 0
        %1020 = vmatprep.subr.bf16.mxu0 0
        %1021 = vmatpush1.bf16.msra.mxu0 %v1008
        %1022 = vmatprep.subr.bf16.mxu0 0
        %1023 = vmatpush1.bf16.msra.mxu0 %v1009
        %1024 = vmatprep.subr.bf16.mxu0 0
        %1025 = vmatpush1.bf16.msra.mxu0 %v1010
        %1026 = vmatprep.subr.bf16.mxu0 0
        %1027 = vmatpush1.bf16.msra.mxu0 %v1011
        %1028 = vmatprep.subr.bf16.mxu0 0
        %1029 = vmatpush1.bf16.msra.mxu0 0
        %1030 = vmatprep.subr.bf16.mxu0 0
        %1031 = vmatpush1.bf16.msra.mxu0 0
        %1032 = vmatprep.subr.bf16.mxu0 0
        %1033 = vmatpush1.bf16.msra.mxu0 0
        %1034 = vmatprep.subr.bf16.mxu0 0
        %1035 = vmatpush1.bf16.msra.mxu0 0
        %1036 = vmatprep.subr.bf16.mxu0 0
        %1037 = vmatpush1.bf16.msra.mxu0 0
        %1038 = vmatprep.subr.bf16.mxu0 0
        %1039 = vmatpush1.bf16.msra.mxu0 0
        %1040 = vmatprep.subr.bf16.mxu0 0
        %1041 = vmatpush1.bf16.msra.mxu0 0
        %1042 = vmatprep.subr.bf16.mxu0 0
        %1043 = vmatpush1.bf16.msra.mxu0 0
        %1044 = vmatprep.subr.bf16.mxu0 0
        %1045 = vmatpush1.bf16.msra.mxu0 0
        %1046 = vmatprep.subr.bf16.mxu0 0
        %1047 = vmatpush1.bf16.msra.mxu0 0
        %1048 = vmatprep.subr.bf16.mxu0 0
        %1049 = vmatpush1.bf16.msra.mxu0 0
        %1050 = vmatprep.subr.bf16.mxu0 0
        %1051 = vmatpush1.bf16.msra.mxu0 0
        %1052 = vmatprep.mubr.bf16.mxu0 0
        %1053 = vmatmul.mubr.bf16.gmra.mrb[0].mxu0 %v1018
        %v1054 = vpop.f32.mrb[0].mxu0
        %v1055 = vadd.f32 0.0, %v1054
        %v1056 = vpop.f32.mrb[0].mxu0
        %v1057 = vpop.f32.mrb[0].mxu0
        %v1058 = vadd.f32 0.0, %v1057
        %v1059 = vpop.f32.mrb[0].mxu0
        %1060 = vdwg.mxu0
        %v1061 = vadd.f32 %v904, %v1055
        %v1062 = vadd.f32 %v905, %v1058
        %1063 = vst.msk [vmem:[%s434] sm:$0xff] %vm445, %v1061
        %1064 = vst.msk [vmem:[%s434 + $0x8] sm:$0xff] %vm445, %v1062
        %s1065 = sand.u32 %s313, 1
        %s1066 = scalar_lea.sflag [#allocation3], %s1065
        %s1067 = sand.u32 %s313, 1
        %s1068 = smul.addr %s1067, 16
        %s1069 = scalar_lea.vmem [#allocation2], %s1068
        // Predicated region
        $region73: #{_mixer_block_call.1} parent=71 // pred_check
          %p1070 = pneg %p323
        $region74: #{_mixer_block_call.1} parent=71 // pred_check_branch
          %1072 = sbr.rel (%p1070) target = $region76
        $region75: #{_mixer_block_call.1} parent=71 // pred_region
          %s1073 = smul.u32 2, %s27
          %s1075 = ssub.s32 256, 256
          %1076 = vsyncadd %s1066, %s1075
          %s1077 = smul.addr %s1073, 128
          %s1078 = scalar_lea.hbm %s13, %s1077
          %s1079 = sshll.u32 %s1069, 4
          %s1080 = int_to_ptr.vmem [resolvable:$true] %s1079
          %1085 = dma.vmem_to_hbm [thread:$0]  %s1080, 256, %s1078, %s1066, 128, 128, 8
        $region76: #{_mixer_block_call.1} parent=71 // pred_fallthru
          _
      $region72: #{_mixer_block_call.1} parent=5 // pred_fallthru
        _
      %p1086 = scmp.le.s32.totalorder 2, %s22
      // Predicated region
      $region77: #{_mixer_block_call.1} parent=5 // pred_check
        %p1087 = pneg %p1086
      $region78: #{_mixer_block_call.1} parent=5 // pred_check_branch
        %1089 = sbr.rel (%p1087) target = $region80
      $region79: #{_mixer_block_call.1} parent=5 // pred_region
        %s1090 = ssub.s32 %s22, 2
        // Predicated region
        $region81: #{_mixer_block_call.1} parent=79 // pred_check
          %p1091 = pneg %p329
        $region82: #{_mixer_block_call.1} parent=79 // pred_check_branch
          %1093 = sbr.rel (%p1091) target = $region84
        $region83: #{_mixer_block_call.1} parent=79 // pred_region
          %s1094 = sand.u32 %s314, 1
          %s1095 = scalar_lea.sflag [#allocation3], %s1094
          %s1096 = sand.u32 %s314, 1
          %s1097 = smul.addr %s1096, 16
          %s1098 = scalar_lea.vmem [#allocation2], %s1097
          %1099 = dma.done %s1095, 256
        $region84: #{_mixer_block_call.1} parent=79 // pred_fallthru
          _
      $region80: #{_mixer_block_call.1} parent=5 // pred_fallthru
        _
    $region6: #{_mixer_block_call.1} parent=1 // loop_footer
      %s26 = sadd.s32 1, %s22
    $region7: #{_mixer_block_call.1} parent=1 // loop_footer_branch
      %21 = sbr.rel target = $region3
    $region8: #{_mixer_block_call.1} parent=1 // loop_exit
      _
    %1100 = vsyncpa [#allocation3], 1
    %s1101 = scalar_lea.sflag [#allocation3], 1
    %1102 = vsyncpa %s1101, 1

</llo_original>
